<compile_context>
chip_gen: v7x
topology: tpu7x:2x2x1
jax: 0.10.0
libtpu: 0.0.40
codegen_flags: <defaults>
</compile_context>

<pallas_src>
import functools
import math

import jax
import jax.numpy as jnp
from jax.experimental import pallas as pl
from jax.experimental.pallas import tpu as pltpu

_LANES = 128


def _softmax_packed_kernel(x_ref, o_ref, *, n):
    """Softmax over aligned groups of `n` contiguous lanes (n divides 128)."""
    x = x_ref[...].astype(jnp.float32)              # (T, 128) lane-dense load
    _, l = x.shape
    lane = jax.lax.broadcasted_iota(jnp.int32, (1, l), 1)

    # Per-step masks: which of the two rotations holds lane's XOR partner.  The
    # source-lane tag is rotated by the *same* roll call as the data, so this is
    # correct regardless of pltpu.roll's rotation direction, and wrapped values are
    # never selected.  (1, 128) int ops -> negligible.
    steps = []
    s = 1
    while s < n:
        src_a = pltpu.roll(lane, s, axis=1)
        steps.append((s, src_a == (lane ^ s)))
        s *= 2

    # Per-group max via XOR butterfly: 2 XLU rolls + 1 select + 1 max per step.
    m = x
    for s, from_a in steps:
        a = pltpu.roll(m, s, axis=1)
        b = pltpu.roll(m, l - s, axis=1)
        m = jnp.maximum(m, jnp.where(from_a, a, b))

    e = jnp.exp(x - m)                               # dense EUP

    # Per-group sum via the same butterfly (exact f32 pairwise adds, every element
    # counted exactly once), already broadcast to all lanes of its group.
    t = e
    for s, from_a in steps:
        a = pltpu.roll(t, s, axis=1)
        b = pltpu.roll(t, l - s, axis=1)
        t = t + jnp.where(from_a, a, b)

    r = pl.reciprocal(t, approx=True)                # EUP vrcp
    r = r * (2.0 - t * r)                            # one Newton step -> ~f32 accuracy
    o_ref[...] = (e * r).astype(o_ref.dtype)         # 128-lane dense store


def _softmax_rowwise_kernel(x_ref, o_ref):
    """Plain last-dim softmax (n >= 128, or n does not divide 128)."""
    # TODO(synk): for n < 128 not dividing 128, lanes could be padded to the next
    # power-of-two divisor of 128 and packed; kept as the simple full-row fallback.
    x = x_ref[...].astype(jnp.float32)
    m = jnp.max(x, axis=-1, keepdims=True)
    e = jnp.exp(x - m)
    s = jnp.sum(e, axis=-1, keepdims=True)
    r = pl.reciprocal(s, approx=True)
    r = r * (2.0 - s * r)
    o_ref[...] = (e * r).astype(o_ref.dtype)


def _pick_vmem_limit_bytes():
    """64 MiB on 128 MiB-VMEM parts (v5e/v6e), 32 MiB on 64 MiB parts (v7x)."""
    try:
        cap = int(getattr(pltpu.get_tpu_info(), "vmem_capacity_bytes"))
    except Exception:
        cap = 64 << 20                               # conservative: smallest (v7x-class)
    return max(32 << 20, min(64 << 20, cap // 2))


def pallas_softmax_last_dim(x):
    """Numerically-stable softmax over the last dim of x (any rank >= 1)."""
    orig_shape = x.shape
    n = orig_shape[-1]
    rows = math.prod(orig_shape[:-1])                # 1 for rank-1 inputs
    if x.size == 0:
        return x

    # Lane packing: `pack` softmax groups side by side -> tiles are 128 lanes wide.
    pack = _LANES // n if (n < _LANES and _LANES % n == 0) else 1
    packed_n = pack * n

    # Pad only to a multiple of `pack` (<= pack-1 rows, 0 for typical shapes); ragged
    # last row-tiles are handled by Pallas's masked edge-block reads/writes.
    x2 = x.reshape(rows, n)
    pad_rows = (-rows) % pack
    if pad_rows:
        x2 = jnp.pad(x2, ((0, pad_rows), (0, 0)))
    packed_rows = (rows + pad_rows) // pack
    x_packed = x2.reshape(packed_rows, packed_n)

    # Generation-aware tile sizing.
    vmem_limit = _pick_vmem_limit_bytes()
    target_tile_bytes = min(6 << 20, max(1 << 20, vmem_limit // 16))
    itemsize = jnp.dtype(x.dtype).itemsize
    sub = max(8, 32 // max(1, itemsize))             # native sublane multiple per dtype
    bytes_per_row = packed_n * 4                     # f32 working copies dominate
    max_rows_per_tile = max(sub, (target_tile_bytes // bytes_per_row) // sub * sub)

    if max_rows_per_tile >= packed_rows:
        row_tile = packed_rows                       # one block, grid=(1,): no extra steps
    else:
        row_tile = max_rows_per_tile
        grid_m = pl.cdiv(packed_rows, row_tile)
        if grid_m % 2:                               # v7x: balance the 2 TensorCores
            row_tile = max(sub, pl.cdiv(pl.cdiv(packed_rows, grid_m + 1), sub) * sub)
            row_tile = min(row_tile, packed_rows)
    grid_m = pl.cdiv(packed_rows, row_tile)

    if pack > 1:
        kernel = functools.partial(_softmax_packed_kernel, n=n)
    else:
        kernel = _softmax_rowwise_kernel

    out_packed = pl.pallas_call(
        kernel,
        out_shape=jax.ShapeDtypeStruct((packed_rows, packed_n), x.dtype),
        grid_spec=pltpu.PrefetchScalarGridSpec(
            num_scalar_prefetch=0,
            grid=(grid_m,),
            in_specs=[pl.BlockSpec((row_tile, packed_n), lambda i: (i, 0))],
            out_specs=pl.BlockSpec((row_tile, packed_n), lambda i: (i, 0)),
        ),
        compiler_params=pltpu.CompilerParams(
            dimension_semantics=("parallel",),
            vmem_limit_bytes=vmem_limit,
        ),
    )(x_packed)

    out = out_packed.reshape(rows + pad_rows, n)
    if pad_rows:
        out = out[:rows]
    return out.reshape(orig_shape)


class SoftmaxModel:
    """Mirror of the PyTorch module: forward(x) = softmax(x, dim=-1)."""

    def __call__(self, x):
        return pallas_softmax_last_dim(x)


if __name__ == "__main__":
    key = jax.random.PRNGKey(0)
    # Small NCHW-like input consistent with the module's forward.
    x = jax.random.normal(key, (2, 4, 16, 16), dtype=jnp.float32)

    model = SoftmaxModel()
    y = jax.block_until_ready(model(x))

    y_ref = jax.nn.softmax(x, axis=-1)
    assert y.shape == x.shape and y.dtype == x.dtype
    assert jnp.allclose(y, y_ref, atol=1e-5, rtol=1e-5)
    assert jnp.allclose(jnp.sum(y, axis=-1), 1.0, atol=1e-5)

    # Secondary coverage: rows not divisible by the packing factor (pad-to-pack path),
    # and the unpacked (n == 128) fallback path.
    k1, k2 = jax.random.split(key)
    x2 = jax.random.normal(k1, (3, 16), dtype=jnp.float32)
    y2 = jax.block_until_ready(pallas_softmax_last_dim(x2))
    assert jnp.allclose(y2, jax.nn.softmax(x2, axis=-1), atol=1e-5, rtol=1e-5)

    x3 = jax.random.normal(k2, (4, 128), dtype=jnp.float32)
    y3 = jax.block_until_ready(pallas_softmax_last_dim(x3))
    assert jnp.allclose(y3, jax.nn.softmax(x3, axis=-1), atol=1e-5, rtol=1e-5)

    print("KERNEL_OK")
</pallas_src>

<mosaic_0001>
module attributes {stable_mosaic.version = 11 : i64} {
  func.func @_softmax_packed_kernel(%arg0: i32, %arg1: memref<16x128xf32, #tpu.memory_space<vmem>>, %arg2: memref<16x128xf32, #tpu.memory_space<vmem>>) attributes {dimension_semantics = [#tpu.dimension_semantics<parallel>], iteration_bounds = array<i64: 1>, scalar_prefetch = 0 : i64, scratch_operands = 0 : i64, tpu.core_type = #tpu.core_type<tc>, window_params = [{transform_indices = @transform_0, window_bounds = array<i64: 16, 128>}, {transform_indices = @transform_1, window_bounds = array<i64: 16, 128>}]} {
    %c0 = arith.constant 0 : index
    %c0_0 = arith.constant 0 : index
    %0 = vector.load %arg1[%c0, %c0_0] : memref<16x128xf32, #tpu.memory_space<vmem>>, vector<16x128xf32>
    %1 = tpu.iota {dimensions = array<i32: 1>} : vector<1x128xi32>
    %c1_i32 = arith.constant 1 : i32
    %2 = tpu.dynamic_rotate %1 by %c1_i32 dim 1 : vector<1x128xi32>, i32 -> vector<1x128xi32>
    %c1_i32_1 = arith.constant 1 : i32
    %3 = vector.broadcast %c1_i32_1 : i32 to vector<1x128xi32>
    %4 = arith.xori %1, %3 : vector<1x128xi32>
    %5 = arith.cmpi eq, %2, %4 : vector<1x128xi32>
    %c2_i32 = arith.constant 2 : i32
    %6 = tpu.dynamic_rotate %1 by %c2_i32 dim 1 : vector<1x128xi32>, i32 -> vector<1x128xi32>
    %c2_i32_2 = arith.constant 2 : i32
    %7 = vector.broadcast %c2_i32_2 : i32 to vector<1x128xi32>
    %8 = arith.xori %1, %7 : vector<1x128xi32>
    %9 = arith.cmpi eq, %6, %8 : vector<1x128xi32>
    %c4_i32 = arith.constant 4 : i32
    %10 = tpu.dynamic_rotate %1 by %c4_i32 dim 1 : vector<1x128xi32>, i32 -> vector<1x128xi32>
    %c4_i32_3 = arith.constant 4 : i32
    %11 = vector.broadcast %c4_i32_3 : i32 to vector<1x128xi32>
    %12 = arith.xori %1, %11 : vector<1x128xi32>
    %13 = arith.cmpi eq, %10, %12 : vector<1x128xi32>
    %c8_i32 = arith.constant 8 : i32
    %14 = tpu.dynamic_rotate %1 by %c8_i32 dim 1 : vector<1x128xi32>, i32 -> vector<1x128xi32>
    %c8_i32_4 = arith.constant 8 : i32
    %15 = vector.broadcast %c8_i32_4 : i32 to vector<1x128xi32>
    %16 = arith.xori %1, %15 : vector<1x128xi32>
    %17 = arith.cmpi eq, %14, %16 : vector<1x128xi32>
    %c1_i32_5 = arith.constant 1 : i32
    %18 = tpu.dynamic_rotate %0 by %c1_i32_5 dim 1 : vector<16x128xf32>, i32 -> vector<16x128xf32>
    %c127_i32 = arith.constant 127 : i32
    %19 = tpu.dynamic_rotate %0 by %c127_i32 dim 1 : vector<16x128xf32>, i32 -> vector<16x128xf32>
    %20 = vector.shape_cast %5 : vector<1x128xi1> to vector<1x128xi1>
    %21 = vector.broadcast %20 : vector<1x128xi1> to vector<16x128xi1>
    %22 = arith.select %21, %18, %19 : vector<16x128xi1>, vector<16x128xf32>
    %23 = arith.maximumf %0, %22 : vector<16x128xf32>
    %c2_i32_6 = arith.constant 2 : i32
    %24 = tpu.dynamic_rotate %23 by %c2_i32_6 dim 1 : vector<16x128xf32>, i32 -> vector<16x128xf32>
    %c126_i32 = arith.constant 126 : i32
    %25 = tpu.dynamic_rotate %23 by %c126_i32 dim 1 : vector<16x128xf32>, i32 -> vector<16x128xf32>
    %26 = vector.shape_cast %9 : vector<1x128xi1> to vector<1x128xi1>
    %27 = vector.broadcast %26 : vector<1x128xi1> to vector<16x128xi1>
    %28 = arith.select %27, %24, %25 : vector<16x128xi1>, vector<16x128xf32>
    %29 = arith.maximumf %23, %28 : vector<16x128xf32>
    %c4_i32_7 = arith.constant 4 : i32
    %30 = tpu.dynamic_rotate %29 by %c4_i32_7 dim 1 : vector<16x128xf32>, i32 -> vector<16x128xf32>
    %c124_i32 = arith.constant 124 : i32
    %31 = tpu.dynamic_rotate %29 by %c124_i32 dim 1 : vector<16x128xf32>, i32 -> vector<16x128xf32>
    %32 = vector.shape_cast %13 : vector<1x128xi1> to vector<1x128xi1>
    %33 = vector.broadcast %32 : vector<1x128xi1> to vector<16x128xi1>
    %34 = arith.select %33, %30, %31 : vector<16x128xi1>, vector<16x128xf32>
    %35 = arith.maximumf %29, %34 : vector<16x128xf32>
    %c8_i32_8 = arith.constant 8 : i32
    %36 = tpu.dynamic_rotate %35 by %c8_i32_8 dim 1 : vector<16x128xf32>, i32 -> vector<16x128xf32>
    %c120_i32 = arith.constant 120 : i32
    %37 = tpu.dynamic_rotate %35 by %c120_i32 dim 1 : vector<16x128xf32>, i32 -> vector<16x128xf32>
    %38 = vector.shape_cast %17 : vector<1x128xi1> to vector<1x128xi1>
    %39 = vector.broadcast %38 : vector<1x128xi1> to vector<16x128xi1>
    %40 = arith.select %39, %36, %37 : vector<16x128xi1>, vector<16x128xf32>
    %41 = arith.maximumf %35, %40 : vector<16x128xf32>
    %42 = arith.subf %0, %41 : vector<16x128xf32>
    %43 = math.exp %42 : vector<16x128xf32>
    %c1_i32_9 = arith.constant 1 : i32
    %44 = tpu.dynamic_rotate %43 by %c1_i32_9 dim 1 : vector<16x128xf32>, i32 -> vector<16x128xf32>
    %c127_i32_10 = arith.constant 127 : i32
    %45 = tpu.dynamic_rotate %43 by %c127_i32_10 dim 1 : vector<16x128xf32>, i32 -> vector<16x128xf32>
    %46 = vector.shape_cast %5 : vector<1x128xi1> to vector<1x128xi1>
    %47 = vector.broadcast %46 : vector<1x128xi1> to vector<16x128xi1>
    %48 = arith.select %47, %44, %45 : vector<16x128xi1>, vector<16x128xf32>
    %49 = arith.addf %43, %48 : vector<16x128xf32>
    %c2_i32_11 = arith.constant 2 : i32
    %50 = tpu.dynamic_rotate %49 by %c2_i32_11 dim 1 : vector<16x128xf32>, i32 -> vector<16x128xf32>
    %c126_i32_12 = arith.constant 126 : i32
    %51 = tpu.dynamic_rotate %49 by %c126_i32_12 dim 1 : vector<16x128xf32>, i32 -> vector<16x128xf32>
    %52 = vector.shape_cast %9 : vector<1x128xi1> to vector<1x128xi1>
    %53 = vector.broadcast %52 : vector<1x128xi1> to vector<16x128xi1>
    %54 = arith.select %53, %50, %51 : vector<16x128xi1>, vector<16x128xf32>
    %55 = arith.addf %49, %54 : vector<16x128xf32>
    %c4_i32_13 = arith.constant 4 : i32
    %56 = tpu.dynamic_rotate %55 by %c4_i32_13 dim 1 : vector<16x128xf32>, i32 -> vector<16x128xf32>
    %c124_i32_14 = arith.constant 124 : i32
    %57 = tpu.dynamic_rotate %55 by %c124_i32_14 dim 1 : vector<16x128xf32>, i32 -> vector<16x128xf32>
    %58 = vector.shape_cast %13 : vector<1x128xi1> to vector<1x128xi1>
    %59 = vector.broadcast %58 : vector<1x128xi1> to vector<16x128xi1>
    %60 = arith.select %59, %56, %57 : vector<16x128xi1>, vector<16x128xf32>
    %61 = arith.addf %55, %60 : vector<16x128xf32>
    %c8_i32_15 = arith.constant 8 : i32
    %62 = tpu.dynamic_rotate %61 by %c8_i32_15 dim 1 : vector<16x128xf32>, i32 -> vector<16x128xf32>
    %c120_i32_16 = arith.constant 120 : i32
    %63 = tpu.dynamic_rotate %61 by %c120_i32_16 dim 1 : vector<16x128xf32>, i32 -> vector<16x128xf32>
    %64 = vector.shape_cast %17 : vector<1x128xi1> to vector<1x128xi1>
    %65 = vector.broadcast %64 : vector<1x128xi1> to vector<16x128xi1>
    %66 = arith.select %65, %62, %63 : vector<16x128xi1>, vector<16x128xf32>
    %67 = arith.addf %61, %66 : vector<16x128xf32>
    %68 = tpu.reciprocal %67 {approx = true} : vector<16x128xf32> -> vector<16x128xf32>
    %69 = arith.mulf %67, %68 : vector<16x128xf32>
    %cst = arith.constant 2.000000e+00 : f32
    %70 = vector.broadcast %cst : f32 to vector<16x128xf32>
    %71 = arith.subf %70, %69 : vector<16x128xf32>
    %72 = arith.mulf %68, %71 : vector<16x128xf32>
    %73 = arith.mulf %43, %72 : vector<16x128xf32>
    %c0_17 = arith.constant 0 : index
    %c0_18 = arith.constant 0 : index
    %74 = vector.load %arg2[%c0_17, %c0_18] : memref<16x128xf32, #tpu.memory_space<vmem>>, vector<16x128xf32>
    tpu.vector_store %arg2[%c0_17, %c0_18], %73 {strides = array<i32>} : memref<16x128xf32, #tpu.memory_space<vmem>>, vector<16x128xf32>,
    return
  }
  func.func @transform_0(%arg0: i32) -> (i32, i32) {
    %c0_i32 = arith.constant 0 : i32
    %c0_i32_0 = arith.constant 0 : i32
    return %arg0, %c0_i32 : i32, i32
  }
  func.func @transform_1(%arg0: i32) -> (i32, i32) {
    %c0_i32 = arith.constant 0 : i32
    %c0_i32_0 = arith.constant 0 : i32
    return %arg0, %c0_i32 : i32, i32
  }
}

</mosaic_0001>

<llo_original>
// kernel: tpu_custom_call.1
$region0: #{tpu_custom_call.1}
  #allocation0 [shape = 'u32[]', space=smem, size = 0x4, offset = 0x4, fixed_abs, tag = 'smem constant byte address 0x4 - core index']
  #allocation1 [shape = 'u32[144,128]{1,0:T(1,128)}', space=vmem, size = 0x12000, scoped, tag = 'internal scratch']
  %s0 = inlined_call_operand.hbm [shape: f32[16,128], index: 0, kind: input, shape index: {}]
  %s1 = inlined_call_operand.hbm [shape: f32[16,128], index: 1, kind: output, shape index: {}]
  %s2 = sld [smem:[#allocation0]]
  $region18: #{tpu_custom_call.1} parent=0
    _
  %s4 = ssub.s32 1, %s2
  %s5 = scalar_select 0, %s4, %s2
  $region1: #{tpu_custom_call.1} parent=0
    #allocation2 [shape = 'u8[8192]{0}', space=vmem, size = 0x2000, scoped, tag = 'input window, operand 0, single buffered']
    #allocation3 [shape = 's32[1]{0}', space=sflag, size = 0x4, scoped, tag = 'scoped memory for tpu_custom_call.1']
    #allocation4 [shape = 's32[1]{0}', space=sflag, size = 0x4, scoped, tag = 'scoped memory for tpu_custom_call.1']
    #allocation5 [shape = 'u8[8192]{0}', space=vmem, size = 0x2000, scoped, tag = 'output window, operand 0, single buffered']
    %6 = vsyncpa [#allocation3], 0
    %7 = vsyncpa [#allocation4], 0
    // Predicated region
    $region2: #{tpu_custom_call.1} parent=1 // pred_check
      _
    $region3: #{tpu_custom_call.1} parent=1 // pred_check_branch
      %9 = sbr.rel (0) target = $region5
    $region4: #{tpu_custom_call.1} parent=1 // pred_region
      %s11 = ssub.s32 256, 256
      %12 = vsyncadd [#allocation3], %s11
      %s13 = sshll.u32 [#allocation2], 4
      %s14 = int_to_ptr.vmem [resolvable:$true] %s13
      %19 = dma.hbm_to_vmem [thread:$0]  %s0, 256, %s14, [#allocation3], 128, 128, 8
    $region5: #{tpu_custom_call.1} parent=1 // pred_fallthru
      _
    // Predicated region
    $region6: #{tpu_custom_call.1} parent=1 // pred_check
      _
    $region7: #{tpu_custom_call.1} parent=1 // pred_check_branch
      %21 = sbr.rel (0) target = $region9
    $region8: #{tpu_custom_call.1} parent=1 // pred_region
      %22 = dma.done [#allocation3], 256
    $region9: #{tpu_custom_call.1} parent=1 // pred_fallthru
      _
    %v23 = vld [vmem:[#allocation2] sm:$0xff]
    %v24 = vld [vmem:[#allocation2 + $0x8] sm:$0xff]
    %v25 = vlaneseq
    %v26 = vand.u32 %v25, 127
    %27 = vrot.lane.b32.xlu0 %v26, 1
    %v28 = vpop.permute.xlu0 %27
    %v29 = vxor.u32 %v26, 1
    %vm30 = vcmp.eq.s32.totalorder %v28, %v29
    %31 = vrot.lane.b32.xlu0 %v26, 2
    %v32 = vpop.permute.xlu0 %31
    %v33 = vxor.u32 %v26, 2
    %vm34 = vcmp.eq.s32.totalorder %v32, %v33
    %35 = vrot.lane.b32.xlu0 %v26, 4
    %v36 = vpop.permute.xlu0 %35
    %v37 = vxor.u32 %v26, 4
    %vm38 = vcmp.eq.s32.totalorder %v36, %v37
    %39 = vrot.lane.b32.xlu0 %v26, 8
    %v40 = vpop.permute.xlu0 %39
    %v41 = vxor.u32 %v26, 8
    %vm42 = vcmp.eq.s32.totalorder %v40, %v41
    %43 = vrot.lane.b32.xlu0 %v23, 1
    %v44 = vpop.permute.xlu0 %43
    %45 = vrot.lane.b32.xlu0 %v24, 1
    %v46 = vpop.permute.xlu0 %45
    %47 = vrot.lane.b32.xlu0 %v23, 127
    %v48 = vpop.permute.xlu0 %47
    %49 = vrot.lane.b32.xlu0 %v24, 127
    %v50 = vpop.permute.xlu0 %49
    %v51 = vsel %vm30, 1, 0
    %v52 = vlaneseq
    %v53 = vshrl.u32 %v52, 7
    %v54 = vsub.s32 0, %v53
    %v55 = vrot.slane %v51, %v54
    %vm56 = vcmp.eq.s32.totalorder %v55, 1
    %v57 = vsel %vm56, %v44, %v48
    %v58 = vsel %vm56, %v46, %v50
    %v59 = vmax.f32 %v23, %v57
    %v60 = vmax.f32 %v24, %v58
    %61 = vrot.lane.b32.xlu0 %v59, 2
    %v62 = vpop.permute.xlu0 %61
    %63 = vrot.lane.b32.xlu0 %v60, 2
    %v64 = vpop.permute.xlu0 %63
    %65 = vrot.lane.b32.xlu0 %v59, 126
    %v66 = vpop.permute.xlu0 %65
    %67 = vrot.lane.b32.xlu0 %v60, 126
    %v68 = vpop.permute.xlu0 %67
    %v69 = vsel %vm34, 1, 0
    %v70 = vlaneseq
    %v71 = vshrl.u32 %v70, 7
    %v72 = vsub.s32 0, %v71
    %v73 = vrot.slane %v69, %v72
    %vm74 = vcmp.eq.s32.totalorder %v73, 1
    %v75 = vsel %vm74, %v62, %v66
    %v76 = vsel %vm74, %v64, %v68
    %v77 = vmax.f32 %v59, %v75
    %v78 = vmax.f32 %v60, %v76
    %79 = vrot.lane.b32.xlu0 %v77, 4
    %v80 = vpop.permute.xlu0 %79
    %81 = vrot.lane.b32.xlu0 %v78, 4
    %v82 = vpop.permute.xlu0 %81
    %83 = vrot.lane.b32.xlu0 %v77, 124
    %v84 = vpop.permute.xlu0 %83
    %85 = vrot.lane.b32.xlu0 %v78, 124
    %v86 = vpop.permute.xlu0 %85
    %v87 = vsel %vm38, 1, 0
    %v88 = vlaneseq
    %v89 = vshrl.u32 %v88, 7
    %v90 = vsub.s32 0, %v89
    %v91 = vrot.slane %v87, %v90
    %vm92 = vcmp.eq.s32.totalorder %v91, 1
    %v93 = vsel %vm92, %v80, %v84
    %v94 = vsel %vm92, %v82, %v86
    %v95 = vmax.f32 %v77, %v93
    %v96 = vmax.f32 %v78, %v94
    %97 = vrot.lane.b32.xlu0 %v95, 8
    %v98 = vpop.permute.xlu0 %97
    %99 = vrot.lane.b32.xlu0 %v96, 8
    %v100 = vpop.permute.xlu0 %99
    %101 = vrot.lane.b32.xlu0 %v95, 120
    %v102 = vpop.permute.xlu0 %101
    %103 = vrot.lane.b32.xlu0 %v96, 120
    %v104 = vpop.permute.xlu0 %103
    %v105 = vsel %vm42, 1, 0
    %v106 = vlaneseq
    %v107 = vshrl.u32 %v106, 7
    %v108 = vsub.s32 0, %v107
    %v109 = vrot.slane %v105, %v108
    %vm110 = vcmp.eq.s32.totalorder %v109, 1
    %v111 = vsel %vm110, %v98, %v102
    %v112 = vsel %vm110, %v100, %v104
    %v113 = vmax.f32 %v95, %v111
    %v114 = vmax.f32 %v96, %v112
    %v115 = vsub.f32 %v23, %v113
    %v116 = vsub.f32 %v24, %v114
    %v117 = vmul.f32 %v115, 1.442695
    %v118 = vpow.pop %v117
    %v119 = vmul.f32 %v116, 1.442695
    %v120 = vpow.pop %v119
    %121 = vrot.lane.b32.xlu0 %v118, 1
    %v122 = vpop.permute.xlu0 %121
    %123 = vrot.lane.b32.xlu0 %v120, 1
    %v124 = vpop.permute.xlu0 %123
    %125 = vrot.lane.b32.xlu0 %v118, 127
    %v126 = vpop.permute.xlu0 %125
    %127 = vrot.lane.b32.xlu0 %v120, 127
    %v128 = vpop.permute.xlu0 %127
    %v129 = vsel %vm56, %v122, %v126
    %v130 = vsel %vm56, %v124, %v128
    %v131 = vadd.f32 %v118, %v129
    %v132 = vadd.f32 %v120, %v130
    %133 = vrot.lane.b32.xlu0 %v131, 2
    %v134 = vpop.permute.xlu0 %133
    %135 = vrot.lane.b32.xlu0 %v132, 2
    %v136 = vpop.permute.xlu0 %135
    %137 = vrot.lane.b32.xlu0 %v131, 126
    %v138 = vpop.permute.xlu0 %137
    %139 = vrot.lane.b32.xlu0 %v132, 126
    %v140 = vpop.permute.xlu0 %139
    %v141 = vsel %vm74, %v134, %v138
    %v142 = vsel %vm74, %v136, %v140
    %v143 = vadd.f32 %v131, %v141
    %v144 = vadd.f32 %v132, %v142
    %145 = vrot.lane.b32.xlu0 %v143, 4
    %v146 = vpop.permute.xlu0 %145
    %147 = vrot.lane.b32.xlu0 %v144, 4
    %v148 = vpop.permute.xlu0 %147
    %149 = vrot.lane.b32.xlu0 %v143, 124
    %v150 = vpop.permute.xlu0 %149
    %151 = vrot.lane.b32.xlu0 %v144, 124
    %v152 = vpop.permute.xlu0 %151
    %v153 = vsel %vm92, %v146, %v150
    %v154 = vsel %vm92, %v148, %v152
    %v155 = vadd.f32 %v143, %v153
    %v156 = vadd.f32 %v144, %v154
    %157 = vrot.lane.b32.xlu0 %v155, 8
    %v158 = vpop.permute.xlu0 %157
    %159 = vrot.lane.b32.xlu0 %v156, 8
    %v160 = vpop.permute.xlu0 %159
    %161 = vrot.lane.b32.xlu0 %v155, 120
    %v162 = vpop.permute.xlu0 %161
    %163 = vrot.lane.b32.xlu0 %v156, 120
    %v164 = vpop.permute.xlu0 %163
    %v165 = vsel %vm110, %v158, %v162
    %v166 = vsel %vm110, %v160, %v164
    %v167 = vadd.f32 %v155, %v165
    %v168 = vadd.f32 %v156, %v166
    %v169 = vrcp.pop %v167
    %v170 = vrcp.pop %v168
    %v171 = vmul.f32 %v167, %v169
    %v172 = vmul.f32 %v168, %v170
    %v173 = vsub.f32 2.0, %v171
    %v174 = vsub.f32 2.0, %v172
    %v175 = vmul.f32 %v169, %v173
    %v176 = vmul.f32 %v170, %v174
    %v177 = vmul.f32 %v118, %v175
    %v178 = vmul.f32 %v120, %v176
    %179 = vst [vmem:[#allocation5] sm:$0xff] %v177
    %180 = vst [vmem:[#allocation5 + $0x8] sm:$0xff] %v178
    // Predicated region
    $region10: #{tpu_custom_call.1} parent=1 // pred_check
      _
    $region11: #{tpu_custom_call.1} parent=1 // pred_check_branch
      %182 = sbr.rel (0) target = $region13
    $region12: #{tpu_custom_call.1} parent=1 // pred_region
      %s184 = ssub.s32 256, 256
      %185 = vsyncadd [#allocation4], %s184
      %s186 = sshll.u32 [#allocation5], 4
      %s187 = int_to_ptr.vmem [resolvable:$true] %s186
      %192 = dma.vmem_to_hbm [thread:$0]  %s187, 256, %s1, [#allocation4], 128, 128, 8
    $region13: #{tpu_custom_call.1} parent=1 // pred_fallthru
      _
    // Predicated region
    $region14: #{tpu_custom_call.1} parent=1 // pred_check
      _
    $region15: #{tpu_custom_call.1} parent=1 // pred_check_branch
      %194 = sbr.rel (0) target = $region17
    $region16: #{tpu_custom_call.1} parent=1 // pred_region
      %195 = dma.done [#allocation4], 256
    $region17: #{tpu_custom_call.1} parent=1 // pred_fallthru
      _
    %196 = vsyncpa [#allocation3], 1
    %197 = vsyncpa [#allocation4], 1

</llo_original>
